<compile_context>
chip_gen: v7x
topology: tpu7x:2x2x1
jax: 0.10.0
libtpu: 0.0.40
codegen_flags: <defaults>
</compile_context>

<pallas_src>
import functools

import jax
import jax.numpy as jnp
from jax.experimental import pallas as pl
from jax.experimental.pallas import tpu as pltpu


_LANE_WIDTH = 512     # flattened lane-dense width (multiple of 128)
_ROW_TILE = 1024      # target rows per grid step -> 2 MiB f32 per input block


def _round_up(x, m):
    return (x + m - 1) // m * m


def _contrastive_loss_kernel(dist_ref, lab_ref, part_ref, *, margin):
    d = dist_ref[...].astype(jnp.float32)
    l = lab_ref[...].astype(jnp.float32)

    hinge = jnp.maximum(jnp.float32(margin) - d, jnp.float32(0.0))
    loss = (jnp.float32(1.0) - l) * d * d + l * hinge * hinge

    rt, lanes = loss.shape  # static at trace time
    # Fold rows into groups of 8 sublanes and add the groups (vreg-wise VPU
    # adds, layout-preserving view): dense (8, lanes) partial per grid step.
    part_ref[0] = jnp.sum(loss.reshape(rt // 8, 8, lanes), axis=0)


def contrastive_loss(distance, labels, margin=1.0, *,
                     lane_width=_LANE_WIDTH, row_tile=_ROW_TILE):
    assert distance.shape == labels.shape
    total = distance.size

    # Flatten to a lane-dense 2-D slab independent of the caller's layout.
    d_flat = jnp.ravel(distance)
    l_flat = jnp.ravel(labels)

    rows = pl.cdiv(total, lane_width)
    # Shrink the tile for small inputs; keep it a multiple of 8 sublanes.
    rt = min(row_tile, _round_up(rows, 8))
    rows_padded = _round_up(rows, rt)
    pad = rows_padded * lane_width - total
    if pad:
        # Zero padding is loss-neutral: (1-0)*0^2 + 0*clamp(m,0)^2 == 0.
        d_flat = jnp.pad(d_flat, (0, pad))
        l_flat = jnp.pad(l_flat, (0, pad))

    d2 = d_flat.reshape(rows_padded, lane_width)
    l2 = l_flat.reshape(rows_padded, lane_width)

    num_blocks = rows_padded // rt
    kernel = functools.partial(_contrastive_loss_kernel, margin=margin)

    partials = pl.pallas_call(
        kernel,
        out_shape=jax.ShapeDtypeStruct((num_blocks, 8, lane_width),
                                       jnp.float32),
        grid_spec=pl.GridSpec(
            grid=(num_blocks,),
            in_specs=[
                pl.BlockSpec((rt, lane_width), lambda i: (i, 0)),
                pl.BlockSpec((rt, lane_width), lambda i: (i, 0)),
            ],
            out_specs=pl.BlockSpec((1, 8, lane_width), lambda i: (i, 0, 0)),
        ),
        compiler_params=pltpu.CompilerParams(
            dimension_semantics=("parallel",)),
    )(d2, l2)

    # Tiny final reduction + mean/2 in plain JAX.
    return jnp.sum(partials) / jnp.float32(2.0 * total)


def _reference(distance, labels, margin=1.0):
    loss = (1.0 - labels) * distance ** 2 \
        + labels * jnp.clip(margin - distance, 0.0, None) ** 2
    return jnp.mean(loss) / 2.0


if __name__ == "__main__":
    key = jax.random.PRNGKey(0)
    k_d, k_l = jax.random.split(key)

    # Small synthetic inputs: a batch of 16 "pairs" each with 128 distances.
    N, D = 16, 128
    distance = jax.random.uniform(k_d, (N, D), dtype=jnp.float32,
                                  minval=0.0, maxval=2.0)
    labels = jax.random.bernoulli(k_l, p=0.5, shape=(N, D)).astype(jnp.float32)

    out = contrastive_loss(distance, labels, margin=1.0)
    out = jax.block_until_ready(out)

    ref = _reference(distance, labels, margin=1.0)
    assert jnp.allclose(out, ref, rtol=1e-5, atol=1e-6), (out, ref)

    print("KERNEL_OK")
</pallas_src>

<mosaic_0001>
module attributes {stable_mosaic.version = 11 : i64} {
  func.func @_contrastive_loss_kernel(%arg0: i32, %arg1: memref<8x512xf32, #tpu.memory_space<vmem>>, %arg2: memref<8x512xf32, #tpu.memory_space<vmem>>, %arg3: memref<1x8x512xf32, #tpu.memory_space<vmem>>) attributes {dimension_semantics = [#tpu.dimension_semantics<parallel>], iteration_bounds = array<i64: 1>, scalar_prefetch = 0 : i64, scratch_operands = 0 : i64, tpu.core_type = #tpu.core_type<tc>, window_params = [{transform_indices = @transform_0, window_bounds = array<i64: 8, 512>}, {transform_indices = @transform_1, window_bounds = array<i64: 8, 512>}, {transform_indices = @transform_2, window_bounds = array<i64: 1, 8, 512>}]} {
    %c0 = arith.constant 0 : index
    %c0_0 = arith.constant 0 : index
    %0 = vector.load %arg1[%c0, %c0_0] : memref<8x512xf32, #tpu.memory_space<vmem>>, vector<8x512xf32>
    %c0_1 = arith.constant 0 : index
    %c0_2 = arith.constant 0 : index
    %1 = vector.load %arg2[%c0_1, %c0_2] : memref<8x512xf32, #tpu.memory_space<vmem>>, vector<8x512xf32>
    %cst = arith.constant 1.000000e+00 : f32
    %2 = vector.broadcast %cst : f32 to vector<8x512xf32>
    %3 = arith.subf %2, %0 : vector<8x512xf32>
    %cst_3 = arith.constant 0.000000e+00 : f32
    %4 = vector.broadcast %cst_3 : f32 to vector<8x512xf32>
    %5 = arith.maximumf %3, %4 : vector<8x512xf32>
    %cst_4 = arith.constant 1.000000e+00 : f32
    %6 = vector.broadcast %cst_4 : f32 to vector<8x512xf32>
    %7 = arith.subf %6, %1 : vector<8x512xf32>
    %8 = arith.mulf %7, %0 : vector<8x512xf32>
    %9 = arith.mulf %8, %0 : vector<8x512xf32>
    %10 = arith.mulf %1, %5 : vector<8x512xf32>
    %11 = arith.mulf %10, %5 : vector<8x512xf32>
    %12 = arith.addf %9, %11 : vector<8x512xf32>
    %13 = vector.shape_cast %12 : vector<8x512xf32> to vector<1x8x512xf32>
    %cst_5 = arith.constant dense<0.000000e+00> : vector<8x512xf32>
    %14 = vector.multi_reduction <add>, %13, %cst_5 [0] : vector<1x8x512xf32> to vector<8x512xf32>
    %c0_6 = arith.constant 0 : index
    %c0_7 = arith.constant 0 : index
    %c0_8 = arith.constant 0 : index
    %15 = vector.load %arg3[%c0_6, %c0_7, %c0_8] : memref<1x8x512xf32, #tpu.memory_space<vmem>>, vector<1x8x512xf32>
    %16 = vector.shape_cast %15 : vector<1x8x512xf32> to vector<8x512xf32>
    %17 = vector.shape_cast %14 : vector<8x512xf32> to vector<1x8x512xf32>
    tpu.vector_store %arg3[%c0_6, %c0_7, %c0_8], %17 {strides = array<i32>} : memref<1x8x512xf32, #tpu.memory_space<vmem>>, vector<1x8x512xf32>,
    return
  }
  func.func @transform_0(%arg0: i32) -> (i32, i32) {
    %c0_i32 = arith.constant 0 : i32
    %c0_i32_0 = arith.constant 0 : i32
    return %arg0, %c0_i32 : i32, i32
  }
  func.func @transform_1(%arg0: i32) -> (i32, i32) {
    %c0_i32 = arith.constant 0 : i32
    %c0_i32_0 = arith.constant 0 : i32
    return %arg0, %c0_i32 : i32, i32
  }
  func.func @transform_2(%arg0: i32) -> (i32, i32, i32) {
    %c0_i32 = arith.constant 0 : i32
    %c0_i32_0 = arith.constant 0 : i32
    %c0_i32_1 = arith.constant 0 : i32
    return %arg0, %c0_i32, %c0_i32_0 : i32, i32, i32
  }
}

</mosaic_0001>

<llo_original>
// kernel: tpu_custom_call.1
$region0: #{tpu_custom_call.1}
  #allocation0 [shape = 'u32[]', space=smem, size = 0x4, offset = 0x4, fixed_abs, tag = 'smem constant byte address 0x4 - core index']
  #allocation1 [shape = 'u32[144,128]{1,0:T(1,128)}', space=vmem, size = 0x12000, scoped, tag = 'internal scratch']
  %s0 = inlined_call_operand.hbm [shape: f32[8,512], index: 0, kind: input, shape index: {}]
  %s1 = inlined_call_operand.hbm [shape: f32[8,512], index: 1, kind: input, shape index: {}]
  %s2 = inlined_call_operand.hbm [shape: f32[1,8,512], index: 2, kind: output, shape index: {}]
  %s3 = sld [smem:[#allocation0]]
  $region26: #{tpu_custom_call.1} parent=0
    _
  %s5 = ssub.s32 1, %s3
  %s6 = scalar_select 0, %s5, %s3
  $region1: #{tpu_custom_call.1} parent=0
    #allocation2 [shape = 'u8[16384]{0}', space=vmem, size = 0x4000, scoped, tag = 'input window, operand 0, single buffered']
    #allocation3 [shape = 's32[1]{0}', space=sflag, size = 0x4, scoped, tag = 'scoped memory for tpu_custom_call.1']
    #allocation4 [shape = 's32[1]{0}', space=sflag, size = 0x4, scoped, tag = 'scoped memory for tpu_custom_call.1']
    #allocation5 [shape = 'u8[16384]{0}', space=vmem, size = 0x4000, scoped, tag = 'input window, operand 1, single buffered']
    #allocation6 [shape = 's32[1]{0}', space=sflag, size = 0x4, scoped, tag = 'scoped memory for tpu_custom_call.1']
    #allocation7 [shape = 'u8[16384]{0}', space=vmem, size = 0x4000, scoped, tag = 'output window, operand 0, single buffered']
    %7 = vsyncpa [#allocation3], 0
    %8 = vsyncpa [#allocation6], 0
    %9 = vsyncpa [#allocation4], 0
    // Predicated region
    $region2: #{tpu_custom_call.1} parent=1 // pred_check
      _
    $region3: #{tpu_custom_call.1} parent=1 // pred_check_branch
      %11 = sbr.rel (0) target = $region5
    $region4: #{tpu_custom_call.1} parent=1 // pred_region
      %s13 = ssub.s32 512, 512
      %14 = vsyncadd [#allocation3], %s13
      %s16 = sshll.u32 [#allocation2], 4
      %s17 = int_to_ptr.vmem [resolvable:$true] %s16
      %19 = dma.hbm_to_vmem [thread:$0]  %s0, 512, %s17, [#allocation3]
    $region5: #{tpu_custom_call.1} parent=1 // pred_fallthru
      _
    // Predicated region
    $region6: #{tpu_custom_call.1} parent=1 // pred_check
      _
    $region7: #{tpu_custom_call.1} parent=1 // pred_check_branch
      %21 = sbr.rel (0) target = $region9
    $region8: #{tpu_custom_call.1} parent=1 // pred_region
      %s23 = ssub.s32 512, 512
      %24 = vsyncadd [#allocation6], %s23
      %s26 = sshll.u32 [#allocation5], 4
      %s27 = int_to_ptr.vmem [resolvable:$true] %s26
      %29 = dma.hbm_to_vmem [thread:$0]  %s1, 512, %s27, [#allocation6]
    $region9: #{tpu_custom_call.1} parent=1 // pred_fallthru
      _
    // Predicated region
    $region10: #{tpu_custom_call.1} parent=1 // pred_check
      _
    $region11: #{tpu_custom_call.1} parent=1 // pred_check_branch
      %31 = sbr.rel (0) target = $region13
    $region12: #{tpu_custom_call.1} parent=1 // pred_region
      %32 = dma.done [#allocation3], 512
    $region13: #{tpu_custom_call.1} parent=1 // pred_fallthru
      _
    // Predicated region
    $region14: #{tpu_custom_call.1} parent=1 // pred_check
      _
    $region15: #{tpu_custom_call.1} parent=1 // pred_check_branch
      %34 = sbr.rel (0) target = $region17
    $region16: #{tpu_custom_call.1} parent=1 // pred_region
      %35 = dma.done [#allocation6], 512
    $region17: #{tpu_custom_call.1} parent=1 // pred_fallthru
      _
    %v36 = vld [vmem:[#allocation2] sm:$0xff]
    %v37 = vld [vmem:[#allocation2 + $0x8] sm:$0xff]
    %v38 = vld [vmem:[#allocation2 + $0x10] sm:$0xff]
    %v39 = vld [vmem:[#allocation2 + $0x18] sm:$0xff]
    %v40 = vld [vmem:[#allocation5] sm:$0xff]
    %v41 = vld [vmem:[#allocation5 + $0x8] sm:$0xff]
    %v42 = vld [vmem:[#allocation5 + $0x10] sm:$0xff]
    %v43 = vld [vmem:[#allocation5 + $0x18] sm:$0xff]
    %v44 = vsub.f32 1.0, %v36
    %v45 = vsub.f32 1.0, %v37
    %v46 = vsub.f32 1.0, %v38
    %v47 = vsub.f32 1.0, %v39
    %v48 = vmax.f32 %v44, 0.0
    %v49 = vmax.f32 %v45, 0.0
    %v50 = vmax.f32 %v46, 0.0
    %v51 = vmax.f32 %v47, 0.0
    %v52 = vsub.f32 1.0, %v40
    %v53 = vsub.f32 1.0, %v41
    %v54 = vsub.f32 1.0, %v42
    %v55 = vsub.f32 1.0, %v43
    %v56 = vmul.f32 %v52, %v36
    %v57 = vmul.f32 %v53, %v37
    %v58 = vmul.f32 %v54, %v38
    %v59 = vmul.f32 %v55, %v39
    %v60 = vmul.f32 %v56, %v36
    %v61 = vmul.f32 %v57, %v37
    %v62 = vmul.f32 %v58, %v38
    %v63 = vmul.f32 %v59, %v39
    %v64 = vmul.f32 %v40, %v48
    %v65 = vmul.f32 %v41, %v49
    %v66 = vmul.f32 %v42, %v50
    %v67 = vmul.f32 %v43, %v51
    %v68 = vmul.f32 %v64, %v48
    %v69 = vmul.f32 %v65, %v49
    %v70 = vmul.f32 %v66, %v50
    %v71 = vmul.f32 %v67, %v51
    %v72 = vadd.f32 %v60, %v68
    %v73 = vadd.f32 %v61, %v69
    %v74 = vadd.f32 %v62, %v70
    %v75 = vadd.f32 %v63, %v71
    %v76 = vadd.f32 %v72, 0.0
    %v77 = vadd.f32 %v73, 0.0
    %v78 = vadd.f32 %v74, 0.0
    %v79 = vadd.f32 %v75, 0.0
    %80 = vst [vmem:[#allocation7] sm:$0xff] %v76
    %81 = vst [vmem:[#allocation7 + $0x8] sm:$0xff] %v77
    %82 = vst [vmem:[#allocation7 + $0x10] sm:$0xff] %v78
    %83 = vst [vmem:[#allocation7 + $0x18] sm:$0xff] %v79
    // Predicated region
    $region18: #{tpu_custom_call.1} parent=1 // pred_check
      _
    $region19: #{tpu_custom_call.1} parent=1 // pred_check_branch
      %85 = sbr.rel (0) target = $region21
    $region20: #{tpu_custom_call.1} parent=1 // pred_region
      %s87 = ssub.s32 512, 512
      %88 = vsyncadd [#allocation4], %s87
      %s90 = sshll.u32 [#allocation7], 4
      %s91 = int_to_ptr.vmem [resolvable:$true] %s90
      %93 = dma.vmem_to_hbm [thread:$0]  %s91, 512, %s2, [#allocation4]
    $region21: #{tpu_custom_call.1} parent=1 // pred_fallthru
      _
    // Predicated region
    $region22: #{tpu_custom_call.1} parent=1 // pred_check
      _
    $region23: #{tpu_custom_call.1} parent=1 // pred_check_branch
      %95 = sbr.rel (0) target = $region25
    $region24: #{tpu_custom_call.1} parent=1 // pred_region
      %96 = dma.done [#allocation4], 512
    $region25: #{tpu_custom_call.1} parent=1 // pred_fallthru
      _
    %97 = vsyncpa [#allocation3], 1
    %98 = vsyncpa [#allocation6], 1
    %99 = vsyncpa [#allocation4], 1

</llo_original>
